<compile_context>
chip_gen: v7x
topology: tpu7x:2x2x1
jax: 0.10.0
libtpu: 0.0.40
codegen_flags: <defaults>
</compile_context>

<pallas_src>
import math
import functools

import jax
import jax.numpy as jnp
from jax.experimental import pallas as pl
from jax.experimental.pallas import tpu as pltpu


# ----------------------- tiled linear (matmul) kernel ------------------------

def _matmul_kernel(x_ref, w_ref, o_ref, acc_ref):
    @pl.when(pl.program_id(2) == 0)
    def _init():
        acc_ref[...] = jnp.zeros_like(acc_ref)

    acc_ref[...] += jnp.dot(x_ref[...], w_ref[...],
                            preferred_element_type=jnp.float32)

    @pl.when(pl.program_id(2) == pl.num_programs(2) - 1)
    def _store():
        o_ref[...] = acc_ref[...].astype(o_ref.dtype)


def _tile_size(dim, target, align):
    """Largest tile <= target that divides `dim` and is `align`-aligned."""
    if dim <= target:
        return dim
    t = (target // align) * align
    while t >= align:
        if dim % t == 0:
            return t
        t -= align
    return dim          # fallback: full extent (always legal)


def linear_pallas(x2d, w, out_dtype, *, tm=256, tn=256, tk=512):
    """x2d: (M, K), w: (K, N) -> (M, N).  bf16 MXU operands, f32 accumulation."""
    M, K = x2d.shape
    K2, N = w.shape
    assert K == K2
    tm = _tile_size(M, tm, 8)
    tn = _tile_size(N, tn, 128)
    tk = _tile_size(K, tk, 128)
    grid = (M // tm, N // tn, K // tk)
    cost = pl.CostEstimate(
        flops=2 * M * N * K, transcendentals=0,
        bytes_accessed=(M * K + K * N) * x2d.dtype.itemsize
        + M * N * jnp.dtype(out_dtype).itemsize)
    return pl.pallas_call(
        _matmul_kernel,
        out_shape=jax.ShapeDtypeStruct((M, N), out_dtype),
        grid=grid,
        in_specs=[pl.BlockSpec((tm, tk), lambda i, j, k: (i, k)),
                  pl.BlockSpec((tk, tn), lambda i, j, k: (k, j))],
        out_specs=pl.BlockSpec((tm, tn), lambda i, j, k: (i, j)),
        scratch_shapes=[pltpu.VMEM((tm, tn), jnp.float32)],
        compiler_params=pltpu.CompilerParams(
            dimension_semantics=("parallel", "parallel", "arbitrary")),
        cost_estimate=cost,
    )(x2d, w)


# ------------- fused per-group RoPE + attention + out_proj kernel ------------

def _attn_outproj_kernel(qkv_ref, cos_ref, sin_ref, rot_ref, wout_ref,
                         o_ref, acc_ref, *, q_per_kv, d_head, scale):
    g = pl.program_id(1)

    @pl.when(g == 0)
    def _init():
        acc_ref[...] = jnp.zeros_like(acc_ref)

    D = d_head
    blk = qkv_ref[0].astype(jnp.float32)          # (T, (q_per_kv + 2) * D)
    cos = cos_ref[...]                            # (T, D)  cols >= R are 1
    sin = sin_ref[...]                            # (T, D)  cols >= R are 0
    rot = rot_ref[...]                            # (D, D)  signed rotate-half

    def rope(x):                                  # x: (T, D) f32, concat-free
        return x * cos + jnp.dot(x, rot, preferred_element_type=jnp.float32) * sin

    # K roped once per group; V passed through.
    k16 = rope(blk[:, q_per_kv * D:(q_per_kv + 1) * D]).astype(jnp.bfloat16)
    v16 = blk[:, (q_per_kv + 1) * D:(q_per_kv + 2) * D].astype(jnp.bfloat16)

    for j in range(q_per_kv):                     # static unroll: group's q heads
        qj = rope(blk[:, j * D:(j + 1) * D])
        q16 = (qj * scale).astype(jnp.bfloat16)
        # QK^T without an explicit transpose: contract last dims of q and k.
        s = jax.lax.dot_general(q16, k16, (((1,), (1,)), ((), ())),
                                preferred_element_type=jnp.float32)   # (T, T)
        m = jnp.max(s, axis=-1, keepdims=True)
        p = jnp.exp(s - m)
        denom = jnp.sum(p, axis=-1, keepdims=True)
        o = jnp.dot(p.astype(jnp.bfloat16), v16,
                    preferred_element_type=jnp.float32)               # (T, D)
        o = o * pl.reciprocal(denom, approx=True)
        # Fused out_proj: contract this head's (T, D) output with its matching
        # (D, d_embed) rows of w_out and accumulate in f32 VMEM.  No (B,T,H*D)
        # intermediate ever reaches HBM and no lane-masked sub-128 stores.
        acc_ref[...] += jnp.dot(o.astype(jnp.bfloat16),
                                wout_ref[j * D:(j + 1) * D, :],
                                preferred_element_type=jnp.float32)

    @pl.when(g == pl.num_programs(1) - 1)
    def _store():
        o_ref[0] = acc_ref[...].astype(o_ref.dtype)


def attention_outproj_pallas(qkv, cos_pad, sin_pad, rot, w_out, *,
                             B, T, G, q_per_kv, d_head, d_embed,
                             out_dtype=jnp.float32):
    """qkv: (B, T, G*(q_per_kv+2)*D) slab -> (B, T, d_embed) projected output."""
    total = q_per_kv + 2
    D = d_head
    H = G * q_per_kv
    if G > 1:
        # Per-group blocks along the lane axis must be 128-aligned on TPU, and
        # the w_out row-block must be sublane (8) aligned.
        assert (total * D) % 128 == 0, (
            "(q_per_kv+2)*d_head must be a multiple of 128 when n_query_groups > 1")
        assert (q_per_kv * D) % 8 == 0, (
            "q_per_kv*d_head must be a multiple of 8 when n_query_groups > 1")
    kern = functools.partial(_attn_outproj_kernel, q_per_kv=q_per_kv, d_head=D,
                             scale=1.0 / math.sqrt(D))
    cost = pl.CostEstimate(
        flops=4 * B * H * T * T * D                  # QK^T + PV
        + 2 * B * (H + G) * T * D * D                # RoPE rotate matmuls
        + 2 * B * H * T * D * d_embed,               # fused out_proj
        transcendentals=B * H * T * T,
        bytes_accessed=qkv.size * qkv.dtype.itemsize
        + B * w_out.size * w_out.dtype.itemsize
        + B * T * d_embed * jnp.dtype(out_dtype).itemsize)
    return pl.pallas_call(
        kern,
        out_shape=jax.ShapeDtypeStruct((B, T, d_embed), out_dtype),
        grid=(B, G),
        in_specs=[
            pl.BlockSpec((1, T, total * D), lambda b, g: (b, 0, g)),
            pl.BlockSpec((T, D), lambda b, g: (0, 0)),
            pl.BlockSpec((T, D), lambda b, g: (0, 0)),
            pl.BlockSpec((D, D), lambda b, g: (0, 0)),
            pl.BlockSpec((q_per_kv * D, d_embed), lambda b, g: (g, 0)),
        ],
        out_specs=pl.BlockSpec((1, T, d_embed), lambda b, g: (b, 0, 0)),
        scratch_shapes=[pltpu.VMEM((T, d_embed), jnp.float32)],
        compiler_params=pltpu.CompilerParams(
            dimension_semantics=("parallel", "arbitrary")),
        cost_estimate=cost,
    )(qkv, cos_pad, sin_pad, rot, w_out)


# ----------------------------------- module ----------------------------------

class SelfAttentionPallas:
    """Mirrors bansuri_tts SelfAttention.forward (bias=False, mask ignored)."""

    def __init__(self, n_head, d_head, n_query_groups, d_embed, rope_n_elem, key):
        self.n_head = n_head
        self.d_head = d_head
        self.n_query_groups = n_query_groups
        self.d_embed = d_embed
        self.rope_n_elem = rope_n_elem
        shape = (n_head + 2 * n_query_groups) * d_head
        k1, k2 = jax.random.split(key)
        # f32 "master" weights (like nn.Linear); kernels consume bf16 copies.
        self.w_qkv = 0.02 * jax.random.normal(k1, (d_embed, shape), jnp.float32)
        self.w_out = 0.02 * jax.random.normal(
            k2, (n_head * d_head, d_embed), jnp.float32)
        self.w_qkv_bf16 = self.w_qkv.astype(jnp.bfloat16)
        self.w_out_bf16 = self.w_out.astype(jnp.bfloat16)

    def _rope_tables(self, cos, sin):
        """Padded cos/sin (T, D) plus the (D, D) signed rotate-half matrix."""
        T, R = cos.shape
        D = self.d_head
        half = R // 2
        pad = D - R
        cos = cos.astype(jnp.float32)
        sin = sin.astype(jnp.float32)
        if pad:
            cos = jnp.concatenate([cos, jnp.ones((T, pad), jnp.float32)], -1)
            sin = jnp.concatenate([sin, jnp.zeros((T, pad), jnp.float32)], -1)
        idx = jnp.arange(half)
        rot = jnp.zeros((D, D), jnp.float32)
        rot = rot.at[idx + half, idx].set(-1.0)   # col c <  half : -x[c + half]
        rot = rot.at[idx, idx + half].set(1.0)    # col c >= half :  x[c - half]
        return cos, sin, rot

    def __call__(self, x, cos, sin, mask=None):
        # `mask` accepted but unused: the PyTorch forward passes None to SDPA.
        B, T, C = x.shape
        G = self.n_query_groups
        D = self.d_head
        H = self.n_head
        q_per_kv = H // G
        total = q_per_kv + 2

        qkv = linear_pallas(x.astype(jnp.bfloat16).reshape(B * T, C),
                            self.w_qkv_bf16, jnp.bfloat16)
        qkv = qkv.reshape(B, T, G * total * D)          # metadata-only reshape

        cos_pad, sin_pad, rot = self._rope_tables(cos, sin)
        out = attention_outproj_pallas(
            qkv, cos_pad, sin_pad, rot, self.w_out_bf16,
            B=B, T=T, G=G, q_per_kv=q_per_kv, d_head=D, d_embed=self.d_embed)
        return out                                       # (B, T, d_embed) f32


# --------------------------- pure-JAX reference (check) ----------------------

def _apply_rope_ref(x, cos, sin):
    hs = x.shape[-1]
    x1 = x[..., :hs // 2]
    x2 = x[..., hs // 2:]
    rotated = jnp.concatenate([-x2, x1], axis=-1)
    return (x * cos + rotated * sin).astype(x.dtype)


def reference(x, cos, sin, w_qkv, w_out, n_head, d_head, n_query_groups,
              rope_n_elem):
    B, T, C = x.shape
    G = n_query_groups
    q_per_kv = n_head // G
    total_qkv = q_per_kv + 2
    qkv = x @ w_qkv
    qkv = qkv.reshape(B, T, G, total_qkv, d_head)
    qkv = jnp.transpose(qkv, (0, 2, 3, 1, 4))
    q = qkv[:, :, :q_per_kv]
    k = jnp.broadcast_to(qkv[:, :, q_per_kv:q_per_kv + 1],
                         (B, G, q_per_kv, T, d_head))
    v = jnp.broadcast_to(qkv[:, :, q_per_kv + 1:],
                         (B, G, q_per_kv, T, d_head))
    q = q.reshape(B, n_head, T, d_head)
    k = k.reshape(B, n_head, T, d_head)
    v = v.reshape(B, n_head, T, d_head)
    q = jnp.concatenate(
        [_apply_rope_ref(q[..., :rope_n_elem], cos, sin), q[..., rope_n_elem:]],
        axis=-1)
    k = jnp.concatenate(
        [_apply_rope_ref(k[..., :rope_n_elem], cos, sin), k[..., rope_n_elem:]],
        axis=-1)
    scale = 1.0 / math.sqrt(d_head)
    s = jnp.einsum("bhqd,bhkd->bhqk", q, k) * scale
    p = jax.nn.softmax(s, axis=-1)
    y = jnp.einsum("bhqk,bhkd->bhqd", p, v)
    y = jnp.transpose(y, (0, 2, 1, 3)).reshape(B, T, n_head * d_head)
    return y @ w_out


# ----------------------------------- main -------------------------------------

if __name__ == "__main__":
    B, T = 2, 8
    n_head, n_query_groups, d_head = 4, 2, 64
    d_embed = 128
    rope_n_elem = 32

    key = jax.random.PRNGKey(0)
    kx, ka, kw = jax.random.split(key, 3)

    x = jax.random.normal(kx, (B, T, d_embed), jnp.float32)
    angles = jax.random.normal(ka, (T, rope_n_elem), jnp.float32)
    cos = jnp.cos(angles)
    sin = jnp.sin(angles)
    mask = jnp.ones((B, 1, T, T), jnp.float32)   # ignored, as in the PyTorch forward

    module = SelfAttentionPallas(n_head, d_head, n_query_groups, d_embed,
                                 rope_n_elem, kw)

    out = jax.block_until_ready(module(x, cos, sin, mask))
    ref = reference(x, cos, sin, module.w_qkv, module.w_out, n_head, d_head,
                    n_query_groups, rope_n_elem)

    assert out.shape == (B, T, d_embed), out.shape
    # bf16 MXU operands + approx reciprocal vs. a pure-f32 reference, so the
    # tolerance is loosened relative to an all-f32 implementation.
    err = float(jnp.max(jnp.abs(out - ref)))
    assert err < 2e-2, err
    print("KERNEL_OK")
</pallas_src>

<mosaic_0001>
module attributes {stable_mosaic.version = 11 : i64} {
  func.func @_matmul_kernel(%arg0: i32, %arg1: i32, %arg2: i32, %arg3: memref<16x128xbf16, #tpu.memory_space<vmem>>, %arg4: memref<128x256xbf16, #tpu.memory_space<vmem>>, %arg5: memref<16x256xbf16, #tpu.memory_space<vmem>>, %arg6: memref<16x256xf32, #tpu.memory_space<vmem>>) attributes {dimension_semantics = [#tpu.dimension_semantics<parallel>, #tpu.dimension_semantics<parallel>, #tpu.dimension_semantics<arbitrary>], iteration_bounds = array<i64: 1, 2, 1>, scalar_prefetch = 0 : i64, scratch_operands = 1 : i64, tpu.core_type = #tpu.core_type<tc>, window_params = [{transform_indices = @transform_0, window_bounds = array<i64: 16, 128>}, {transform_indices = @transform_1, window_bounds = array<i64: 128, 256>}, {transform_indices = @transform_2, window_bounds = array<i64: 16, 256>}]} {
    %c0_i32 = arith.constant 0 : i32
    %0 = arith.cmpi eq, %arg2, %c0_i32 : i32
    %1 = arith.extui %0 : i1 to i32
    %c0_i32_0 = arith.constant 0 : i32
    %2 = arith.cmpi ne, %1, %c0_i32_0 : i32
    scf.if %2 {
      %cst_10 = arith.constant 0.000000e+00 : f32
      %12 = vector.broadcast %cst_10 : f32 to vector<16x256xf32>
      %c0_11 = arith.constant 0 : index
      %c0_12 = arith.constant 0 : index
      %13 = vector.load %arg6[%c0_11, %c0_12] : memref<16x256xf32, #tpu.memory_space<vmem>>, vector<16x256xf32>
      tpu.vector_store %arg6[%c0_11, %c0_12], %12 {strides = array<i32>} : memref<16x256xf32, #tpu.memory_space<vmem>>, vector<16x256xf32>,
    } else {
    }
    %c0 = arith.constant 0 : index
    %c0_1 = arith.constant 0 : index
    %3 = vector.load %arg6[%c0, %c0_1] : memref<16x256xf32, #tpu.memory_space<vmem>>, vector<16x256xf32>
    %c0_2 = arith.constant 0 : index
    %c0_3 = arith.constant 0 : index
    %4 = vector.load %arg3[%c0_2, %c0_3] : memref<16x128xbf16, #tpu.memory_space<vmem>>, vector<16x128xbf16>
    %c0_4 = arith.constant 0 : index
    %c0_5 = arith.constant 0 : index
    %5 = vector.load %arg4[%c0_4, %c0_5] : memref<128x256xbf16, #tpu.memory_space<vmem>>, vector<128x256xbf16>
    %cst = arith.constant dense<0.000000e+00> : vector<16x256xf32>
    %6 = tpu.matmul %4, %5, %cst {dimension_numbers = #tpu.dot_dimension_numbers<[1], [0], [0], [1], [0, 0, 1, 1], [], []>} : vector<16x128xbf16>, vector<128x256xbf16>, vector<16x256xf32> -> vector<16x256xf32>
    %7 = arith.addf %3, %6 : vector<16x256xf32>
    %c0_6 = arith.constant 0 : index
    %c0_7 = arith.constant 0 : index
    %8 = vector.load %arg6[%c0_6, %c0_7] : memref<16x256xf32, #tpu.memory_space<vmem>>, vector<16x256xf32>
    tpu.vector_store %arg6[%c0_6, %c0_7], %7 {strides = array<i32>} : memref<16x256xf32, #tpu.memory_space<vmem>>, vector<16x256xf32>,
    %c0_i32_8 = arith.constant 0 : i32
    %9 = arith.cmpi eq, %arg2, %c0_i32_8 : i32
    %10 = arith.extui %9 : i1 to i32
    %c0_i32_9 = arith.constant 0 : i32
    %11 = arith.cmpi ne, %10, %c0_i32_9 : i32
    scf.if %11 {
      %c0_10 = arith.constant 0 : index
      %c0_11 = arith.constant 0 : index
      %12 = vector.load %arg6[%c0_10, %c0_11] : memref<16x256xf32, #tpu.memory_space<vmem>>, vector<16x256xf32>
      %13 = arith.truncf %12 : vector<16x256xf32> to vector<16x256xbf16>
      %c0_12 = arith.constant 0 : index
      %c0_13 = arith.constant 0 : index
      %14 = vector.load %arg5[%c0_12, %c0_13] : memref<16x256xbf16, #tpu.memory_space<vmem>>, vector<16x256xbf16>
      tpu.vector_store %arg5[%c0_12, %c0_13], %13 {strides = array<i32>} : memref<16x256xbf16, #tpu.memory_space<vmem>>, vector<16x256xbf16>,
    } else {
    }
    return
  }
  func.func @transform_0(%arg0: i32, %arg1: i32, %arg2: i32) -> (i32, i32) {
    %c0_i32 = arith.constant 0 : i32
    return %arg0, %arg2 : i32, i32
  }
  func.func @transform_1(%arg0: i32, %arg1: i32, %arg2: i32) -> (i32, i32) {
    %c0_i32 = arith.constant 0 : i32
    return %arg2, %arg1 : i32, i32
  }
  func.func @transform_2(%arg0: i32, %arg1: i32, %arg2: i32) -> (i32, i32) {
    %c0_i32 = arith.constant 0 : i32
    return %arg0, %arg1 : i32, i32
  }
}

</mosaic_0001>

<llo_original>
// kernel: tpu_custom_call.1
$region0: #{tpu_custom_call.1}
  #allocation0 [shape = 'u32[]', space=smem, size = 0x4, offset = 0x4, fixed_abs, tag = 'smem constant byte address 0x4 - core index']
  #allocation1 [shape = 'u32[144,128]{1,0:T(1,128)}', space=vmem, size = 0x12000, scoped, tag = 'internal scratch']
  #allocation2 [shape = 'f32[16,256]{1,0:T(8,128)}', space=vmem, size = 0x4000, scoped, tag = 'scratch operand']
  %s0 = inlined_call_operand.hbm [shape: bf16[16,128], index: 0, kind: input, shape index: {}]
  %s1 = inlined_call_operand.hbm [shape: bf16[128,512], index: 1, kind: input, shape index: {}]
  %s2 = inlined_call_operand.hbm [shape: bf16[16,512], index: 2, kind: output, shape index: {}]
  %s3 = sld [smem:[#allocation0]]
  $region57: #{tpu_custom_call.1} parent=0
    _
  %s5 = ssub.s32 1, %s3
  %s6 = scalar_select 0, %s5, %s3
  $region1: #{tpu_custom_call.1} parent=0
    #allocation3 [shape = 'u8[4096]{0}', space=vmem, size = 0x1000, scoped, tag = 'input window, operand 0, single buffered']
    #allocation4 [shape = 's32[2]{0}', space=sflag, size = 0x8, scoped, tag = 'scoped memory for tpu_custom_call.1']
    #allocation5 [shape = 's32[2]{0}', space=sflag, size = 0x8, scoped, tag = 'scoped memory for tpu_custom_call.1']
    #allocation6 [shape = 'u8[131072]{0}', space=vmem, size = 0x20000, scoped, tag = 'input window, operand 1']
    #allocation7 [shape = 's32[2]{0}', space=sflag, size = 0x8, scoped, tag = 'scoped memory for tpu_custom_call.1']
    #allocation8 [shape = 'u8[16384]{0}', space=vmem, size = 0x4000, scoped, tag = 'output window, operand 0']
    %7 = vsyncpa [#allocation4], 0
    %8 = vsyncpa [#allocation7], 0
    %s9 = scalar_lea.sflag [#allocation7], 1
    %10 = vsyncpa %s9, 0
    %11 = vsyncpa [#allocation5], 0
    %s12 = scalar_lea.sflag [#allocation5], 1
    %13 = vsyncpa %s12, 0
    loop: start=0, step=1, limit=4
    $region2: #{tpu_custom_call.1} parent=1 // loop_pre_header
      _
    $region3: #{tpu_custom_call.1} parent=1 // loop_header
      %s15 = sphi 0, %s19
      %p16 = scmp.ge.s32.totalorder %s15, 4
      %s22 = sphi 0, %s41
      %s23 = sphi 0, %s37
      %s24 = sphi 0, %s33
      %s25 = sphi 0, %s22
      %s26 = sphi 0, %s23
      %s27 = sphi 0, %s24
      %s28 = sphi 0, %s25
      %s29 = sphi 0, %s26
      %s30 = sphi 0, %s27
      %s46 = sphi 0, %s48
      %s49 = sphi 0, %s46
      %s50 = sphi 0, %s49
      %s66 = sphi 0, %s50
      %s74 = sphi 0, %s76
      %s77 = sphi 0, %s74
      %s78 = sphi 0, %s77
      %s94 = sphi 0, %s78
      %s102 = sphi 0, %s104
      %s105 = sphi 0, %s102
      %s106 = sphi 0, %s105
      %s122 = sphi 0, %s106
    $region4: #{tpu_custom_call.1} parent=1 // loop_header_branch
      %18 = sbr.rel (%p16) target = $region8
    $region5: #{tpu_custom_call.1} parent=1 // loop_body
      %s20 = ssub.s32 %s15, 1
      %s21 = ssub.s32 %s15, 2
      %s31 = sadd.s32 1, %s24
      %p32 = scmp.ge.s32.totalorder %s31, 1
      %s33 = scalar_select %p32, 0, %s31
      %s34 = sadd.s32 1, %s23
      %s35 = scalar_select %p32, %s34, %s23
      %p36 = scmp.ge.s32.totalorder %s35, 2
      %s37 = scalar_select %p36, 0, %s35
      %s38 = sadd.s32 1, %s22
      %s39 = scalar_select %p36, %s38, %s22
      %p40 = scmp.ge.s32.totalorder %s39, 1
      %s41 = scalar_select %p40, 0, %s39
      %s42 = ssub.s32 %s22, %s41
      %s43 = ssub.s32 %s24, %s33
      %s44 = sor.u32 %s42, %s43
      %p45 = scmp.eq.s32.totalorder %s44, 0
      %s47 = sadd.s32 %s46, 1
      %s48 = scalar_select %p45, %s46, %s47
      %p51 = pneg %p45
      %p52 = scmp.eq.s32.totalorder %s15, 1
      %p53 = por %p51, %p52
      %p54 = scmp.ne.s32.totalorder %s46, %s49
      %p55 = scmp.eq.s32.totalorder %s15, 0
      %p56 = por %p54, %p55
      %p57 = scmp.ne.s32.totalorder %s46, %s49
      %p58 = scmp.eq.s32.totalorder %s20, 1
      %p59 = por %p57, %p58
      %p60 = scmp.ne.s32.totalorder %s49, %s50
      %p61 = scmp.eq.s32.totalorder %s20, 0
      %p62 = por %p60, %p61
      %p63 = scmp.ne.s32.totalorder %s49, %s50
      %p64 = scmp.eq.s32.totalorder %s21, 1
      %p65 = por %p63, %p64
      %p67 = scmp.ne.s32.totalorder %s50, %s66
      %p68 = scmp.eq.s32.totalorder %s21, 0
      %p69 = por %p67, %p68
      %s70 = ssub.s32 %s24, %s33
      %s71 = ssub.s32 %s23, %s37
      %s72 = sor.u32 %s70, %s71
      %p73 = scmp.eq.s32.totalorder %s72, 0
      %s75 = sadd.s32 %s74, 1
      %s76 = scalar_select %p73, %s74, %s75
      %p79 = pneg %p73
      %p80 = scmp.eq.s32.totalorder %s15, 1
      %p81 = por %p79, %p80
      %p82 = scmp.ne.s32.totalorder %s74, %s77
      %p83 = scmp.eq.s32.totalorder %s15, 0
      %p84 = por %p82, %p83
      %p85 = scmp.ne.s32.totalorder %s74, %s77
      %p86 = scmp.eq.s32.totalorder %s20, 1
      %p87 = por %p85, %p86
      %p88 = scmp.ne.s32.totalorder %s77, %s78
      %p89 = scmp.eq.s32.totalorder %s20, 0
      %p90 = por %p88, %p89
      %p91 = scmp.ne.s32.totalorder %s77, %s78
      %p92 = scmp.eq.s32.totalorder %s21, 1
      %p93 = por %p91, %p92
      %p95 = scmp.ne.s32.totalorder %s78, %s94
      %p96 = scmp.eq.s32.totalorder %s21, 0
      %p97 = por %p95, %p96
      %s98 = ssub.s32 %s22, %s41
      %s99 = ssub.s32 %s23, %s37
      %s100 = sor.u32 %s98, %s99
      %p101 = scmp.eq.s32.totalorder %s100, 0
      %s103 = sadd.s32 %s102, 1
      %s104 = scalar_select %p101, %s102, %s103
      %p107 = pneg %p101
      %p108 = scmp.eq.s32.totalorder %s15, 1
      %p109 = por %p107, %p108
      %p110 = scmp.ne.s32.totalorder %s102, %s105
      %p111 = scmp.eq.s32.totalorder %s15, 0
      %p112 = por %p110, %p111
      %p113 = scmp.ne.s32.totalorder %s102, %s105
      %p114 = scmp.eq.s32.totalorder %s20, 1
      %p115 = por %p113, %p114
      %p116 = scmp.ne.s32.totalorder %s105, %s106
      %p117 = scmp.eq.s32.totalorder %s20, 0
      %p118 = por %p116, %p117
      %p119 = scmp.ne.s32.totalorder %s105, %s106
      %p120 = scmp.eq.s32.totalorder %s21, 1
      %p121 = por %p119, %p120
      %p123 = scmp.ne.s32.totalorder %s106, %s122
      %p124 = scmp.eq.s32.totalorder %s21, 0
      %p125 = por %p123, %p124
      %p126 = scmp.le.s32.totalorder 1, %s15
      %p127 = scmp.lt.s32.totalorder %s15, 3
      %p128 = pnand %p126, %p127
      %p129 = pneg %p128
      // Predicated region
      $region9: #{tpu_custom_call.1} parent=5 // pred_check
        _
      $region10: #{tpu_custom_call.1} parent=5 // pred_check_branch
        %131 = sbr.rel (%p128) target = $region12
      $region11: #{tpu_custom_call.1} parent=5 // pred_region
        %s132 = ssub.s32 %s15, 1
        // Predicated region
        $region13: #{tpu_custom_call.1} parent=11 // pred_check
          %p133 = pneg %p62
        $region14: #{tpu_custom_call.1} parent=11 // pred_check_branch
          %135 = sbr.rel (%p133) target = $region16
        $region15: #{tpu_custom_call.1} parent=11 // pred_region
          %s136 = smul.u32 2, %s25
          %s138 = ssub.s32 128, 128
          %139 = vsyncadd [#allocation4], %s138
          %s140 = sadd.s32 %s27, %s136
          %s141 = smul.addr %s140, 64
          %s142 = scalar_lea.hbm %s0, %s141
          %s143 = sshll.u32 [#allocation3], 4
          %s144 = int_to_ptr.vmem [resolvable:$true] %s143
          %149 = dma.hbm_to_vmem [thread:$0]  %s142, 128, %s144, [#allocation4], 64, 64, 4
        $region16: #{tpu_custom_call.1} parent=11 // pred_fallthru
          _
      $region12: #{tpu_custom_call.1} parent=5 // pred_fallthru
        _
      %p150 = scmp.lt.s32.totalorder %s15, 2
      // Predicated region
      $region17: #{tpu_custom_call.1} parent=5 // pred_check
        %p151 = pneg %p150
      $region18: #{tpu_custom_call.1} parent=5 // pred_check_branch
        %153 = sbr.rel (%p151) target = $region20
      $region19: #{tpu_custom_call.1} parent=5 // pred_region
        // Predicated region
        $region21: #{tpu_custom_call.1} parent=19 // pred_check
          %p154 = pneg %p84
        $region22: #{tpu_custom_call.1} parent=19 // pred_check_branch
          %156 = sbr.rel (%p154) target = $region24
        $region23: #{tpu_custom_call.1} parent=19 // pred_region
          %s157 = sand.u32 %s74, 1
          %s158 = scalar_lea.sflag [#allocation7], %s157
          %s159 = sand.u32 %s74, 1
          %s160 = smul.addr %s159, 128
          %s161 = scalar_lea.vmem [#allocation6], %s160
          %s162 = smul.u32 16, %s24
          %s163 = smul.u32 2, %s23
          %s165 = ssub.s32 2048, 2048
          %166 = vsyncadd %s158, %s165
          %s167 = smul.addr %s162, 4
          %s168 = sadd.s32 %s163, %s167
          %s169 = smul.addr %s168, 64
          %s170 = scalar_lea.hbm %s1, %s169
          %s171 = sshll.u32 %s161, 4
          %s172 = int_to_ptr.vmem [resolvable:$true] %s171
          %177 = dma.hbm_to_vmem [thread:$0]  %s170, 2048, %s172, %s158, 256, 128, 8
        $region24: #{tpu_custom_call.1} parent=19 // pred_fallthru
          _
      $region20: #{tpu_custom_call.1} parent=5 // pred_fallthru
        _
      %p178 = scmp.le.s32.totalorder 1, %s15
      %p179 = scmp.lt.s32.totalorder %s15, 3
      %p180 = pnand %p178, %p179
      %p181 = pneg %p180
      // Predicated region
      $region25: #{tpu_custom_call.1} parent=5 // pred_check
        _
      $region26: #{tpu_custom_call.1} parent=5 // pred_check_branch
        %183 = sbr.rel (%p180) target = $region28
      $region27: #{tpu_custom_call.1} parent=5 // pred_region
        %s184 = ssub.s32 %s15, 1
        // Predicated region
        $region29: #{tpu_custom_call.1} parent=27 // pred_check
          %p185 = pneg %p62
        $region30: #{tpu_custom_call.1} parent=27 // pred_check_branch
          %187 = sbr.rel (%p185) target = $region32
        $region31: #{tpu_custom_call.1} parent=27 // pred_region
          %188 = dma.done [#allocation4], 128
        $region32: #{tpu_custom_call.1} parent=27 // pred_fallthru
          _
        %s189 = sand.u32 %s77, 1
        %s190 = scalar_lea.sflag [#allocation7], %s189
        %s191 = sand.u32 %s77, 1
        %s192 = smul.addr %s191, 128
        %s193 = scalar_lea.vmem [#allocation6], %s192
        // Predicated region
        $region33: #{tpu_custom_call.1} parent=27 // pred_check
          %p194 = pneg %p90
        $region34: #{tpu_custom_call.1} parent=27 // pred_check_branch
          %196 = sbr.rel (%p194) target = $region36
        $region35: #{tpu_custom_call.1} parent=27 // pred_region
          %197 = dma.done %s190, 2048
        $region36: #{tpu_custom_call.1} parent=27 // pred_fallthru
          _
        %p198 = pneg %p62
        %p199 = pneg %p59
        %s200 = sand.u32 %s77, 1
        %s201 = scalar_lea.sflag [#allocation7], %s200
        %s202 = sand.u32 %s77, 1
        %s203 = smul.addr %s202, 128
        %s204 = scalar_lea.vmem [#allocation6], %s203
        %p205 = pneg %p90
        %p206 = pneg %p87
        %p207 = pneg %p118
        %p208 = pneg %p115
        %s209 = sand.u32 %s105, 1
        %s210 = scalar_lea.sflag [#allocation5], %s209
        %s211 = sand.u32 %s105, 1
        %s212 = smul.addr %s211, 16
        %s213 = scalar_lea.vmem [#allocation8], %s212
        %s214 = smul.u32 2, %s25
        %s215 = smul.u32 16, %s27
        %s216 = smul.u32 2, %s26
        %s217 = smul.u32 2, %s25
        %s218 = smul.u32 2, %s26
        %p220 = scmp.eq.s32.totalorder %s27, 0
        // Predicated region
        $region37: #{tpu_custom_call.1} parent=27 // pred_check
          %p221 = pneg %p220
        $region38: #{tpu_custom_call.1} parent=27 // pred_check_branch
          %223 = sbr.rel (%p221) target = $region40
        $region39: #{tpu_custom_call.1} parent=27 // pred_region
          %224 = vst [vmem:[#allocation2] sm:$0xff] 0.0
          %225 = vst [vmem:[#allocation2 + $0x8] sm:$0xff] 0.0
          %226 = vst [vmem:[#allocation2 + $0x10] sm:$0xff] 0.0
          %227 = vst [vmem:[#allocation2 + $0x18] sm:$0xff] 0.0
        $region40: #{tpu_custom_call.1} parent=27 // pred_fallthru
          _
        %v228 = vld [vmem:[#allocation2] sm:$0xff]
        %v229 = vld [vmem:[#allocation2 + $0x8] sm:$0xff]
        %v230 = vld [vmem:[#allocation2 + $0x10] sm:$0xff]
        %v231 = vld [vmem:[#allocation2 + $0x18] sm:$0xff]
        %v232 = vld [vmem:[#allocation3] sm:$0xf]
        %v233 = vld [vmem:[#allocation3 + $0x4] sm:$0xf]
        %v234 = vld [vmem:[%s193] sm:$0xff]
        %v235 = vld [vmem:[%s193 + $0x8] sm:$0xff]
        %v236 = vld [vmem:[%s193 + $0x10] sm:$0xff]
        %v237 = vld [vmem:[%s193 + $0x18] sm:$0xff]
        %v238 = vld [vmem:[%s193 + $0x20] sm:$0xff]
        %v239 = vld [vmem:[%s193 + $0x28] sm:$0xff]
        %v240 = vld [vmem:[%s193 + $0x30] sm:$0xff]
        %v241 = vld [vmem:[%s193 + $0x38] sm:$0xff]
        %v242 = vld [vmem:[%s193 + $0x40] sm:$0xff]
        %v243 = vld [vmem:[%s193 + $0x48] sm:$0xff]
        %v244 = vld [vmem:[%s193 + $0x50] sm:$0xff]
        %v245 = vld [vmem:[%s193 + $0x58] sm:$0xff]
        %v246 = vld [vmem:[%s193 + $0x60] sm:$0xff]
        %v247 = vld [vmem:[%s193 + $0x68] sm:$0xff]
        %v248 = vld [vmem:[%s193 + $0x70] sm:$0xff]
        %v249 = vld [vmem:[%s193 + $0x78] sm:$0xff]
        %v252 = vunpack.c.l.b16 %v232
        %v253 = vunpack.c.l.b16 %v233
        %v254 = vpack.c.b16 %v253, %v252
        %v272 = vunpack.c.l.b16 %v234
        %v273 = vunpack.c.h.b16 %v234
        %v274 = vunpack.c.l.b16 %v235
        %v275 = vunpack.c.h.b16 %v235
        %v276 = vunpack.c.l.b16 %v236
        %v277 = vunpack.c.h.b16 %v236
        %v278 = vunpack.c.l.b16 %v237
        %v279 = vunpack.c.h.b16 %v237
        %v280 = vunpack.c.l.b16 %v238
        %v281 = vunpack.c.h.b16 %v238
        %v282 = vunpack.c.l.b16 %v239
        %v283 = vunpack.c.h.b16 %v239
        %v284 = vunpack.c.l.b16 %v240
        %v285 = vunpack.c.h.b16 %v240
        %v286 = vunpack.c.l.b16 %v241
        %v287 = vunpack.c.h.b16 %v241
        %v288 = vunpack.c.l.b16 %v242
        %v289 = vunpack.c.h.b16 %v242
        %v290 = vunpack.c.l.b16 %v243
        %v291 = vunpack.c.h.b16 %v243
        %v292 = vunpack.c.l.b16 %v244
        %v293 = vunpack.c.h.b16 %v244
        %v294 = vunpack.c.l.b16 %v245
        %v295 = vunpack.c.h.b16 %v245
        %v296 = vunpack.c.l.b16 %v246
        %v297 = vunpack.c.h.b16 %v246
        %v298 = vunpack.c.l.b16 %v247
        %v299 = vunpack.c.h.b16 %v247
        %v300 = vunpack.c.l.b16 %v248
        %v301 = vunpack.c.h.b16 %v248
        %v302 = vunpack.c.l.b16 %v249
        %v303 = vunpack.c.h.b16 %v249
        %v304 = vpack.c.b16 %v274, %v272
        %v305 = vpack.c.b16 %v275, %v273
        %v306 = vpack.c.b16 %v278, %v276
        %v307 = vpack.c.b16 %v279, %v277
        %v308 = vpack.c.b16 %v282, %v280
        %v309 = vpack.c.b16 %v283, %v281
        %v310 = vpack.c.b16 %v286, %v284
        %v311 = vpack.c.b16 %v287, %v285
        %v312 = vpack.c.b16 %v290, %v288
        %v313 = vpack.c.b16 %v291, %v289
        %v314 = vpack.c.b16 %v294, %v292
        %v315 = vpack.c.b16 %v295, %v293
        %v316 = vpack.c.b16 %v298, %v296
        %v317 = vpack.c.b16 %v299, %v297
        %v318 = vpack.c.b16 %v302, %v300
        %v319 = vpack.c.b16 %v303, %v301
        %336 = vmatprep.subr.bf16.mxu0 %v305
        %337 = vmatpush1.bf16.msra.mxu0 %v304
        %338 = vmatprep.subr.bf16.mxu0 %v307
        %339 = vmatpush1.bf16.msra.mxu0 %v306
        %340 = vmatprep.subr.bf16.mxu0 %v309
        %341 = vmatpush1.bf16.msra.mxu0 %v308
        %342 = vmatprep.subr.bf16.mxu0 %v311
        %343 = vmatpush1.bf16.msra.mxu0 %v310
        %344 = vmatprep.subr.bf16.mxu0 %v313
        %345 = vmatpush1.bf16.msra.mxu0 %v312
        %346 = vmatprep.subr.bf16.mxu0 %v315
        %347 = vmatpush1.bf16.msra.mxu0 %v314
        %348 = vmatprep.subr.bf16.mxu0 %v317
        %349 = vmatpush1.bf16.msra.mxu0 %v316
        %350 = vmatprep.subr.bf16.mxu0 %v319
        %351 = vmatpush1.bf16.msra.mxu0 %v318
        %352 = vmatprep.subr.bf16.mxu0 0
        %353 = vmatpush1.bf16.msra.mxu0 0
        %354 = vmatprep.subr.bf16.mxu0 0
        %355 = vmatpush1.bf16.msra.mxu0 0
        %356 = vmatprep.subr.bf16.mxu0 0
        %357 = vmatpush1.bf16.msra.mxu0 0
        %358 = vmatprep.subr.bf16.mxu0 0
        %359 = vmatpush1.bf16.msra.mxu0 0
        %360 = vmatprep.subr.bf16.mxu0 0
        %361 = vmatpush1.bf16.msra.mxu0 0
        %362 = vmatprep.subr.bf16.mxu0 0
        %363 = vmatpush1.bf16.msra.mxu0 0
        %364 = vmatprep.subr.bf16.mxu0 0
        %365 = vmatpush1.bf16.msra.mxu0 0
        %366 = vmatprep.subr.bf16.mxu0 0
        %367 = vmatpush1.bf16.msra.mxu0 0
        %368 = vmatprep.mubr.bf16.mxu0 0
        %369 = vmatmul.mubr.bf16.gmra.mrb[0].mxu0 %v254
        %v370 = vpop.f32.mrb[0].mxu0
        %v371 = vadd.f32 0.0, %v370
        %v372 = vpop.f32.mrb[0].mxu0
        %v373 = vadd.f32 0.0, %v372
        %v374 = vpop.f32.mrb[0].mxu0
        %v375 = vadd.f32 0.0, %v374
        %v376 = vpop.f32.mrb[0].mxu0
        %v377 = vadd.f32 0.0, %v376
        %378 = vdwg.mxu0
        %v379 = vadd.f32 %v228, %v371
        %v380 = vadd.f32 %v229, %v373
        %v381 = vadd.f32 %v230, %v375
        %v382 = vadd.f32 %v231, %v377
        %383 = vst [vmem:[#allocation2] sm:$0xff] %v379
        %384 = vst [vmem:[#allocation2 + $0x8] sm:$0xff] %v380
        %385 = vst [vmem:[#allocation2 + $0x10] sm:$0xff] %v381
        %386 = vst [vmem:[#allocation2 + $0x18] sm:$0xff] %v382
        // Predicated region
        $region41: #{tpu_custom_call.1} parent=27 // pred_check
          %p387 = pneg %p220
        $region42: #{tpu_custom_call.1} parent=27 // pred_check_branch
          %389 = sbr.rel (%p387) target = $region44
        $region43: #{tpu_custom_call.1} parent=27 // pred_region
          %v390 = vld [vmem:[#allocation2] sm:$0xff]
          %v391 = vld [vmem:[#allocation2 + $0x8] sm:$0xff]
          %v392 = vld [vmem:[#allocation2 + $0x10] sm:$0xff]
          %v393 = vld [vmem:[#allocation2 + $0x18] sm:$0xff]
          %v394 = vpack.c.bf16 %v392, %v390
          %v395 = vpack.c.bf16 %v393, %v391
          %v398 = vunpack.c.l.b16 %v394
          %v399 = vunpack.c.l.b16 %v395
          %v400 = vunpack.c.h.b16 %v394
          %v401 = vunpack.c.h.b16 %v395
          %v402 = vpack.c.b16 %v399, %v398
          %v403 = vpack.c.b16 %v401, %v400
          %406 = vst [vmem:[%s213] sm:$0xff] %v402
          %407 = vst [vmem:[%s213 + $0x8] sm:$0xff] %v403
        $region44: #{tpu_custom_call.1} parent=27 // pred_fallthru
          _
        %s408 = sand.u32 %s105, 1
        %s409 = scalar_lea.sflag [#allocation5], %s408
        %s410 = sand.u32 %s105, 1
        %s411 = smul.addr %s410, 16
        %s412 = scalar_lea.vmem [#allocation8], %s411
        // Predicated region
        $region45: #{tpu_custom_call.1} parent=27 // pred_check
          %p413 = pneg %p115
        $region46: #{tpu_custom_call.1} parent=27 // pred_check_branch
          %415 = sbr.rel (%p413) target = $region48
        $region47: #{tpu_custom_call.1} parent=27 // pred_region
          %s416 = smul.u32 2, %s25
          %s417 = smul.u32 2, %s26
          %s419 = ssub.s32 256, 256
          %420 = vsyncadd %s409, %s419
          %s421 = smul.addr %s416, 4
          %s422 = sadd.s32 %s417, %s421
          %s423 = smul.addr %s422, 64
          %s424 = scalar_lea.hbm %s2, %s423
          %s425 = sshll.u32 %s412, 4
          %s426 = int_to_ptr.vmem [resolvable:$true] %s425
          %431 = dma.vmem_to_hbm [thread:$0]  %s426, 256, %s424, %s409, 128, 256, 8
        $region48: #{tpu_custom_call.1} parent=27 // pred_fallthru
          _
      $region28: #{tpu_custom_call.1} parent=5 // pred_fallthru
        _
      %p432 = scmp.le.s32.totalorder 2, %s15
      // Predicated region
      $region49: #{tpu_custom_call.1} parent=5 // pred_check
        %p433 = pneg %p432
      $region50: #{tpu_custom_call.1} parent=5 // pred_check_branch
        %435 = sbr.rel (%p433) target = $region52
      $region51: #{tpu_custom_call.1} parent=5 // pred_region
        %s436 = ssub.s32 %s15, 2
        // Predicated region
        $region53: #{tpu_custom_call.1} parent=51 // pred_check
          %p437 = pneg %p121
        $region54: #{tpu_custom_call.1} parent=51 // pred_check_branch
          %439 = sbr.rel (%p437) target = $region56
        $region55: #{tpu_custom_call.1} parent=51 // pred_region
          %s440 = sand.u32 %s106, 1
          %s441 = scalar_lea.sflag [#allocation5], %s440
          %s442 = sand.u32 %s106, 1
          %s443 = smul.addr %s442, 16
          %s444 = scalar_lea.vmem [#allocation8], %s443
          %445 = dma.done %s441, 256
        $region56: #{tpu_custom_call.1} parent=51 // pred_fallthru
          _
      $region52: #{tpu_custom_call.1} parent=5 // pred_fallthru
        _
    $region6: #{tpu_custom_call.1} parent=1 // loop_footer
      %s19 = sadd.s32 1, %s15
    $region7: #{tpu_custom_call.1} parent=1 // loop_footer_branch
      %14 = sbr.rel target = $region3
    $region8: #{tpu_custom_call.1} parent=1 // loop_exit
      _
    %446 = vsyncpa [#allocation4], 1
    %s447 = scalar_lea.sflag [#allocation4], 1
    %448 = vsyncpa %s447, 1
    %449 = vsyncpa [#allocation7], 1
    %s450 = scalar_lea.sflag [#allocation7], 1
    %451 = vsyncpa %s450, 1
    %452 = vsyncpa [#allocation5], 1
    %s453 = scalar_lea.sflag [#allocation5], 1
    %454 = vsyncpa %s453, 1

</llo_original>
